<compile_context>
chip_gen: v5e
topology: v5e:2x2
jax: 0.10.0
libtpu: 0.0.40
codegen_flags: <defaults>
</compile_context>

<pallas_src>
import functools

import jax
import jax.numpy as jnp
from jax import lax
from jax.experimental import pallas as pl
from jax.experimental.pallas import tpu as pltpu


def _round_up(v, m):
    return (v + m - 1) // m * m


def _pick_tk(k_dim, pref):
    """Largest multiple of 128 that divides K and is <= pref.

    Falls back to the full K (single K tile) when K <= pref or when K is not a
    multiple of 128 (a full-extent block dim is always legal)."""
    if k_dim <= pref or k_dim % 128 != 0:
        return k_dim
    t = (pref // 128) * 128
    while t >= 128:
        if k_dim % t == 0:
            return t
        t -= 128
    return k_dim


def _act_linear_kernel(x_ref, w_ref, b_ref, out_ref, sq_ref, acc_ref, *,
                       block_m, m_total):
    """One (i, j, k) grid step.

    x_ref : (tm, tk)      activations tile
    w_ref : (tn, tk)      weight tile (out_features x in_features, untransposed)
    b_ref : (1, tn)       bias tile
    out_ref: (tm, tn)     linear output tile
    sq_ref : (nk, 1, tk)  per-M-tile sum-of-squares partials (resident per i)
    acc_ref: (tm, tn) f32 VMEM matmul accumulator (scratch)
    """
    i = pl.program_id(0)   # M tile  ("parallel": independent rows + sq rows)
    j = pl.program_id(1)   # N tile
    k = pl.program_id(2)   # K tile  (reduction axis, innermost)

    @pl.when(k == 0)
    def _init_acc():
        acc_ref[...] = jnp.zeros_like(acc_ref)

    x = x_ref[...]                                          # single load, reused

    # out += x @ W.T : contract x's last dim with the weight's last dim (the
    # weight stays (N, K); no wrapper transpose / HBM round trip).
    acc_ref[...] += lax.dot_general(
        x, w_ref[...],
        dimension_numbers=(((1,), (1,)), ((), ())),
        preferred_element_type=jnp.float32)

    # Per-feature sum of squares: computed once per (i, k) (only on the first
    # N tile), stored into the k-th row of the per-i partials block.
    @pl.when(j == 0)
    def _acc_sq():
        xf = x.astype(jnp.float32)
        if m_total % block_m != 0:
            # Ragged last M tile: rows past the true M hold unspecified data
            # (Pallas block-boundary reads); zero them before squaring.
            rows = lax.broadcasted_iota(jnp.int32, xf.shape, 0)
            xf = jnp.where(rows < (m_total - i * block_m), xf, 0.0)
        sq_ref[k] = jnp.sum(xf * xf, axis=0, keepdims=True)  # (1, tk)

    @pl.when(k == pl.num_programs(2) - 1)
    def _finish():
        out_ref[...] = (acc_ref[...]
                        + b_ref[...].astype(jnp.float32)).astype(out_ref.dtype)


def act_linear_forward(x, weight, bias, activation_norms, n_samples, *,
                       tm=256, tn=256, tk=None):
    """Pallas implementation of ActLinear.forward (mask=None path).

    Args:
      x:      (..., in_features) activations.
      weight: (out_features, in_features)    -- PyTorch nn.Linear convention.
      bias:   (out_features,)
      activation_norms: (in_features,) running buffer.
      n_samples: running sample count (python int or traced scalar).

    Returns:
      out:                  (..., out_features)
      new_activation_norms: (in_features,)
      new_n_samples
    """
    in_features = x.shape[-1]
    out_features = weight.shape[0]
    lead_shape = x.shape[:-1]

    x2d = x.reshape(-1, in_features)                        # (M, K)
    M, K = x2d.shape
    N = out_features

    if weight.dtype != x2d.dtype:
        weight = weight.astype(x2d.dtype)

    isz = jnp.dtype(x2d.dtype).itemsize
    sublane = {4: 8, 2: 16, 1: 32}.get(isz, 8)

    # ---- tile sizes -------------------------------------------------------
    if tk is None:
        tk = 512 if isz >= 4 else 1024
    tk_eff = _pick_tk(K, tk)
    nk = K // tk_eff

    tm = _round_up(max(tm, sublane), sublane)
    tm_eff = min(tm, _round_up(M, sublane))
    ni = pl.cdiv(M, tm_eff)

    tn = _round_up(max(tn, 128), 128)
    tn_eff = min(tn, _round_up(N, 128))     # lane-dense (>=128) output tiles
    nj = pl.cdiv(N, tn_eff)

    b_row = bias.reshape(1, N)

    kernel = functools.partial(_act_linear_kernel, block_m=tm_eff, m_total=M)

    # Advisory cost + explicit VMEM budget (footprint is K-independent now;
    # 40 MiB cap leaves headroom on v7x's 64 MiB physical VMEM).
    flops = 2 * M * N * K + 3 * M * K
    bytes_accessed = int((nj * M * K + ni * N * K + M * N + N) * isz
                         + 4 * (ni * K))
    vmem_est = (2 * (tm_eff * tk_eff + tn_eff * tk_eff + tn_eff
                     + tm_eff * tn_eff) * isz
                + tm_eff * tn_eff * 4 + 2 * K * 4)
    vmem_limit = int(min(max(2 * vmem_est, 32 * 1024 * 1024),
                         40 * 1024 * 1024))

    out2d, sq_part = pl.pallas_call(
        kernel,
        out_shape=(
            jax.ShapeDtypeStruct((M, N), x.dtype),
            jax.ShapeDtypeStruct((ni * nk, 1, tk_eff), jnp.float32),
        ),
        grid_spec=pltpu.PrefetchScalarGridSpec(
            num_scalar_prefetch=0,
            grid=(ni, nj, nk),
            in_specs=[
                pl.BlockSpec((tm_eff, tk_eff), lambda i, j, k: (i, k)),   # x
                pl.BlockSpec((tn_eff, tk_eff), lambda i, j, k: (j, k)),   # W
                pl.BlockSpec((1, tn_eff), lambda i, j, k: (0, j)),        # bias
            ],
            out_specs=(
                pl.BlockSpec((tm_eff, tn_eff), lambda i, j, k: (i, j)),   # out
                pl.BlockSpec((nk, 1, tk_eff), lambda i, j, k: (i, 0, 0)), # sq
            ),
            scratch_shapes=[pltpu.VMEM((tm_eff, tn_eff), jnp.float32)],
        ),
        compiler_params=pltpu.CompilerParams(
            dimension_semantics=("parallel", "arbitrary", "arbitrary"),
            vmem_limit_bytes=vmem_limit,
        ),
        cost_estimate=pl.CostEstimate(
            flops=flops, transcendentals=0, bytes_accessed=bytes_accessed),
    )(x2d, weight, b_row)

    # Combine the per-M-tile partials (tiny (ni, K) reduction in the wrapper).
    sq_total = sq_part.reshape(ni, K).sum(axis=0)           # (K,) f32

    bs = M
    ns = jnp.asarray(n_samples, jnp.float32)
    denom = ns + jnp.float32(bs)
    new_norms = (activation_norms * (ns / denom)
                 + sq_total * (1.0 / denom)).astype(activation_norms.dtype)
    new_n_samples = n_samples + bs

    out = out2d.reshape(*lead_shape, out_features)
    return out, new_norms, new_n_samples


if __name__ == "__main__":
    # ---- test 1: batch=2, seq=8, 32 -> 64 (single tile everywhere) --------
    B, S, IN, OUT = 2, 8, 32, 64
    key = jax.random.PRNGKey(0)
    kx, kw, kb = jax.random.split(key, 3)
    x = jax.random.normal(kx, (B, S, IN), dtype=jnp.float32)
    weight = jax.random.normal(kw, (OUT, IN), dtype=jnp.float32) * 0.05
    bias = jax.random.normal(kb, (OUT,), dtype=jnp.float32) * 0.01

    activation_norms = jnp.zeros((IN,), dtype=jnp.float32)
    n_samples = 0

    out, new_norms, new_n = act_linear_forward(
        x, weight, bias, activation_norms, n_samples)
    jax.block_until_ready(out)
    jax.block_until_ready(new_norms)

    x2d = x.reshape(-1, IN)
    ref_out = x @ weight.T + bias
    ref_norms = (x2d * x2d).sum(axis=0) / x2d.shape[0]
    assert jnp.allclose(out, ref_out, atol=2e-2, rtol=2e-2)
    assert jnp.allclose(new_norms, ref_norms, atol=1e-3, rtol=1e-3)
    assert int(new_n) == x2d.shape[0]

    # ---- test 2: ragged M (=400, row-mask path) + multiple N tiles --------
    B2, S2, IN2, OUT2 = 4, 100, 128, 384
    kx2, kw2, kb2 = jax.random.split(jax.random.PRNGKey(1), 3)
    x2 = jax.random.normal(kx2, (B2, S2, IN2), dtype=jnp.float32)
    w2 = jax.random.normal(kw2, (OUT2, IN2), dtype=jnp.float32) * 0.02
    b2 = jax.random.normal(kb2, (OUT2,), dtype=jnp.float32) * 0.01
    norms0 = jnp.full((IN2,), 0.5, dtype=jnp.float32)
    n0 = 64

    out2, new_norms2, new_n2 = act_linear_forward(
        x2, w2, b2, norms0, n0, tm=256, tn=256)
    jax.block_until_ready(out2)
    jax.block_until_ready(new_norms2)

    x2_2d = x2.reshape(-1, IN2)
    bs2 = x2_2d.shape[0]
    ref_out2 = x2 @ w2.T + b2
    ref_norms2 = norms0 * (n0 / (n0 + bs2)) + (x2_2d * x2_2d).sum(0) / (n0 + bs2)
    assert jnp.allclose(out2, ref_out2, atol=2e-2, rtol=2e-2)
    assert jnp.allclose(new_norms2, ref_norms2, atol=1e-3, rtol=1e-3)
    assert int(new_n2) == n0 + bs2

    # ---- test 3: K tiling (K=256, tk=128 -> 2 K tiles, acc over k) --------
    B3, S3, IN3, OUT3 = 2, 8, 256, 128
    kx3, kw3, kb3 = jax.random.split(jax.random.PRNGKey(2), 3)
    x3 = jax.random.normal(kx3, (B3, S3, IN3), dtype=jnp.float32)
    w3 = jax.random.normal(kw3, (OUT3, IN3), dtype=jnp.float32) * 0.05
    b3 = jax.random.normal(kb3, (OUT3,), dtype=jnp.float32) * 0.01
    norms0_3 = jnp.full((IN3,), 0.25, dtype=jnp.float32)
    n0_3 = 32

    out3, new_norms3, new_n3 = act_linear_forward(
        x3, w3, b3, norms0_3, n0_3, tk=128)
    jax.block_until_ready(out3)
    jax.block_until_ready(new_norms3)

    x3_2d = x3.reshape(-1, IN3)
    bs3 = x3_2d.shape[0]
    ref_out3 = x3 @ w3.T + b3
    ref_norms3 = (norms0_3 * (n0_3 / (n0_3 + bs3))
                  + (x3_2d * x3_2d).sum(0) / (n0_3 + bs3))
    assert jnp.allclose(out3, ref_out3, atol=2e-2, rtol=2e-2)
    assert jnp.allclose(new_norms3, ref_norms3, atol=1e-3, rtol=1e-3)
    assert int(new_n3) == n0_3 + bs3

    print("KERNEL_OK")
</pallas_src>

<mosaic_0001>
module attributes {stable_mosaic.version = 11 : i64} {
  func.func @_act_linear_kernel(%arg0: i32, %arg1: i32, %arg2: i32, %arg3: memref<16x32xf32, #tpu.memory_space<vmem>>, %arg4: memref<128x32xf32, #tpu.memory_space<vmem>>, %arg5: memref<1x128xf32, #tpu.memory_space<vmem>>, %arg6: memref<16x128xf32, #tpu.memory_space<vmem>>, %arg7: memref<1x1x32xf32, #tpu.memory_space<vmem>>, %arg8: memref<16x128xf32, #tpu.memory_space<vmem>>) attributes {dimension_semantics = [#tpu.dimension_semantics<parallel>, #tpu.dimension_semantics<arbitrary>, #tpu.dimension_semantics<arbitrary>], iteration_bounds = array<i64: 1, 1, 1>, scalar_prefetch = 0 : i64, scratch_operands = 1 : i64, tpu.core_type = #tpu.core_type<tc>, window_params = [{transform_indices = @transform_0, window_bounds = array<i64: 16, 32>}, {transform_indices = @transform_1, window_bounds = array<i64: 128, 32>}, {transform_indices = @transform_2, window_bounds = array<i64: 1, 128>}, {transform_indices = @transform_3, window_bounds = array<i64: 16, 128>}, {transform_indices = @transform_4, window_bounds = array<i64: 1, 1, 32>}]} {
    %c0_i32 = arith.constant 0 : i32
    %0 = arith.cmpi eq, %arg2, %c0_i32 : i32
    %1 = arith.extui %0 : i1 to i32
    %c0_i32_0 = arith.constant 0 : i32
    %2 = arith.cmpi ne, %1, %c0_i32_0 : i32
    scf.if %2 {
      %cst_12 = arith.constant 0.000000e+00 : f32
      %15 = vector.broadcast %cst_12 : f32 to vector<16x128xf32>
      %c0_13 = arith.constant 0 : index
      %c0_14 = arith.constant 0 : index
      %16 = vector.load %arg8[%c0_13, %c0_14] : memref<16x128xf32, #tpu.memory_space<vmem>>, vector<16x128xf32>
      tpu.vector_store %arg8[%c0_13, %c0_14], %15 {strides = array<i32>} : memref<16x128xf32, #tpu.memory_space<vmem>>, vector<16x128xf32>,
    } else {
    }
    %c0 = arith.constant 0 : index
    %c0_1 = arith.constant 0 : index
    %3 = vector.load %arg3[%c0, %c0_1] : memref<16x32xf32, #tpu.memory_space<vmem>>, vector<16x32xf32>
    %c0_2 = arith.constant 0 : index
    %c0_3 = arith.constant 0 : index
    %4 = vector.load %arg8[%c0_2, %c0_3] : memref<16x128xf32, #tpu.memory_space<vmem>>, vector<16x128xf32>
    %c0_4 = arith.constant 0 : index
    %c0_5 = arith.constant 0 : index
    %5 = vector.load %arg4[%c0_4, %c0_5] : memref<128x32xf32, #tpu.memory_space<vmem>>, vector<128x32xf32>
    %cst = arith.constant dense<0.000000e+00> : vector<16x128xf32>
    %6 = tpu.matmul %3, %5, %cst {dimension_numbers = #tpu.dot_dimension_numbers<[1], [1], [0], [0], [0, 0, 1, 0], [], []>} : vector<16x32xf32>, vector<128x32xf32>, vector<16x128xf32> -> vector<16x128xf32>
    %7 = arith.addf %4, %6 : vector<16x128xf32>
    %c0_6 = arith.constant 0 : index
    %c0_7 = arith.constant 0 : index
    %8 = vector.load %arg8[%c0_6, %c0_7] : memref<16x128xf32, #tpu.memory_space<vmem>>, vector<16x128xf32>
    tpu.vector_store %arg8[%c0_6, %c0_7], %7 {strides = array<i32>} : memref<16x128xf32, #tpu.memory_space<vmem>>, vector<16x128xf32>,
    %c0_i32_8 = arith.constant 0 : i32
    %9 = arith.cmpi eq, %arg1, %c0_i32_8 : i32
    %10 = arith.extui %9 : i1 to i32
    %c0_i32_9 = arith.constant 0 : i32
    %11 = arith.cmpi ne, %10, %c0_i32_9 : i32
    scf.if %11 {
      %15 = arith.mulf %3, %3 : vector<16x32xf32>
      %cst_12 = arith.constant dense<0.000000e+00> : vector<32xf32>
      %16 = vector.multi_reduction <add>, %15, %cst_12 [0] : vector<16x32xf32> to vector<32xf32>
      %17 = vector.shape_cast %16 : vector<32xf32> to vector<1x32xf32>
      %18 = arith.index_cast %arg2 : i32 to index
      %c0_13 = arith.constant 0 : index
      %c0_14 = arith.constant 0 : index
      %19 = vector.load %arg7[%18, %c0_13, %c0_14] : memref<1x1x32xf32, #tpu.memory_space<vmem>>, vector<1x1x32xf32>
      %20 = vector.shape_cast %19 : vector<1x1x32xf32> to vector<1x32xf32>
      %21 = vector.shape_cast %17 : vector<1x32xf32> to vector<1x1x32xf32>
      tpu.vector_store %arg7[%18, %c0_13, %c0_14], %21 {strides = array<i32>} : memref<1x1x32xf32, #tpu.memory_space<vmem>>, vector<1x1x32xf32>,
    } else {
    }
    %c0_i32_10 = arith.constant 0 : i32
    %12 = arith.cmpi eq, %arg2, %c0_i32_10 : i32
    %13 = arith.extui %12 : i1 to i32
    %c0_i32_11 = arith.constant 0 : i32
    %14 = arith.cmpi ne, %13, %c0_i32_11 : i32
    scf.if %14 {
      %c0_12 = arith.constant 0 : index
      %c0_13 = arith.constant 0 : index
      %15 = vector.load %arg8[%c0_12, %c0_13] : memref<16x128xf32, #tpu.memory_space<vmem>>, vector<16x128xf32>
      %c0_14 = arith.constant 0 : index
      %c0_15 = arith.constant 0 : index
      %16 = vector.load %arg5[%c0_14, %c0_15] : memref<1x128xf32, #tpu.memory_space<vmem>>, vector<1x128xf32>
      %17 = vector.broadcast %16 : vector<1x128xf32> to vector<16x128xf32>
      %18 = arith.addf %15, %17 : vector<16x128xf32>
      %c0_16 = arith.constant 0 : index
      %c0_17 = arith.constant 0 : index
      %19 = vector.load %arg6[%c0_16, %c0_17] : memref<16x128xf32, #tpu.memory_space<vmem>>, vector<16x128xf32>
      tpu.vector_store %arg6[%c0_16, %c0_17], %18 {strides = array<i32>} : memref<16x128xf32, #tpu.memory_space<vmem>>, vector<16x128xf32>,
    } else {
    }
    return
  }
  func.func @transform_0(%arg0: i32, %arg1: i32, %arg2: i32) -> (i32, i32) {
    %c0_i32 = arith.constant 0 : i32
    return %arg0, %arg2 : i32, i32
  }
  func.func @transform_1(%arg0: i32, %arg1: i32, %arg2: i32) -> (i32, i32) {
    %c0_i32 = arith.constant 0 : i32
    return %arg1, %arg2 : i32, i32
  }
  func.func @transform_2(%arg0: i32, %arg1: i32, %arg2: i32) -> (i32, i32) {
    %c0_i32 = arith.constant 0 : i32
    %c0_i32_0 = arith.constant 0 : i32
    return %c0_i32, %arg1 : i32, i32
  }
  func.func @transform_3(%arg0: i32, %arg1: i32, %arg2: i32) -> (i32, i32) {
    %c0_i32 = arith.constant 0 : i32
    return %arg0, %arg1 : i32, i32
  }
  func.func @transform_4(%arg0: i32, %arg1: i32, %arg2: i32) -> (i32, i32, i32) {
    %c0_i32 = arith.constant 0 : i32
    %c0_i32_0 = arith.constant 0 : i32
    %c0_i32_1 = arith.constant 0 : i32
    return %arg0, %c0_i32, %c0_i32_0 : i32, i32, i32
  }
}

</mosaic_0001>

<llo_original>
// kernel: tpu_custom_call.1
$region0: #{tpu_custom_call.1}
  #allocation0 [shape = 'u32[]', space=smem, size = 0x4, offset = 0x4, fixed_abs, tag = 'smem constant byte address 0x4 - core index']
  #allocation1 [shape = 'u32[72,128]{1,0:T(1,128)}', space=vmem, size = 0x9000, scoped, tag = 'internal scratch']
  #allocation2 [shape = 'f32[16,128]{1,0:T(8,128)}', space=vmem, size = 0x2000, scoped, tag = 'scratch operand']
  %s0 = inlined_call_operand.vmem [shape: f32[16,32], index: 0, kind: input, shape index: {}]
  %s1 = inlined_call_operand.vmem [shape: f32[64,32], index: 1, kind: input, shape index: {}]
  %s2 = inlined_call_operand.vmem [shape: f32[1,64], index: 2, kind: input, shape index: {}]
  %s3 = inlined_call_operand.hbm [shape: f32[16,64], index: 3, kind: output, shape index: {0}]
  %s4 = inlined_call_operand.hbm [shape: f32[1,1,32], index: 4, kind: output, shape index: {1}]
  %5 = xla_tuple %s3, %s4
  %s6 = sld [smem:[#allocation0]]
  $region42: #{tpu_custom_call.1} parent=0
    _
  %s8 = ssub.s32 1, %s6
  %s9 = scalar_select 0, %s8, %s6
  $region1: #{tpu_custom_call.1} parent=0
    #allocation3 [shape = 'u8[8192]{0}', space=vmem, size = 0x2000, scoped, tag = 'output window, operand 0, single buffered']
    #allocation4 [shape = 's32[1]{0}', space=sflag, size = 0x4, scoped, tag = 'scoped memory for tpu_custom_call.1']
    #allocation5 [shape = 'u8[512]{0}', space=vmem, size = 0x400, scoped, tag = 'output window, operand 1, single buffered']
    #allocation6 [shape = 's32[1]{0}', space=sflag, size = 0x4, scoped, tag = 'scoped memory for tpu_custom_call.1']
    %10 = vsyncpa [#allocation4], 0
    %11 = vsyncpa [#allocation6], 0
    // Predicated region
    $region2: #{tpu_custom_call.1} parent=1 // pred_check
      _
    $region3: #{tpu_custom_call.1} parent=1 // pred_check_branch
      %13 = sbr.rel (0) target = $region5
    $region4: #{tpu_custom_call.1} parent=1 // pred_region
      _
    $region5: #{tpu_custom_call.1} parent=1 // pred_fallthru
      _
    // Predicated region
    $region6: #{tpu_custom_call.1} parent=1 // pred_check
      _
    $region7: #{tpu_custom_call.1} parent=1 // pred_check_branch
      %15 = sbr.rel (0) target = $region9
    $region8: #{tpu_custom_call.1} parent=1 // pred_region
      _
    $region9: #{tpu_custom_call.1} parent=1 // pred_fallthru
      _
    // Predicated region
    $region10: #{tpu_custom_call.1} parent=1 // pred_check
      _
    $region11: #{tpu_custom_call.1} parent=1 // pred_check_branch
      %17 = sbr.rel (0) target = $region13
    $region12: #{tpu_custom_call.1} parent=1 // pred_region
      _
    $region13: #{tpu_custom_call.1} parent=1 // pred_fallthru
      _
    %p18 = scmp.eq.s32.totalorder 0, 0
    // Predicated region
    $region14: #{tpu_custom_call.1} parent=1 // pred_check
      %p19 = pneg %p18
    $region15: #{tpu_custom_call.1} parent=1 // pred_check_branch
      %21 = sbr.rel (%p19) target = $region17
    $region16: #{tpu_custom_call.1} parent=1 // pred_region
      %22 = vst [vmem:[#allocation2] sm:$0xff] 0.0
      %23 = vst [vmem:[#allocation2 + $0x8] sm:$0xff] 0.0
    $region17: #{tpu_custom_call.1} parent=1 // pred_fallthru
      _
    %v24 = vld [vmem:[%s0] sm:$0xff]
    %v25 = vld [vmem:[%s0 + $0x8] sm:$0xff]
    %v26 = vld [vmem:[#allocation2] sm:$0xff]
    %v27 = vld [vmem:[#allocation2 + $0x8] sm:$0xff]
    %v28 = vld [vmem:[%s1] sm:$0xff]
    %v29 = vld [vmem:[%s1 + $0x8] sm:$0xff]
    %v30 = vld [vmem:[%s1 + $0x10] sm:$0xff]
    %v31 = vld [vmem:[%s1 + $0x18] sm:$0xff]
    %v32 = vld [vmem:[%s1 + $0x20] sm:$0xff]
    %v33 = vld [vmem:[%s1 + $0x28] sm:$0xff]
    %v34 = vld [vmem:[%s1 + $0x30] sm:$0xff]
    %v35 = vld [vmem:[%s1 + $0x38] sm:$0xff]
    %v36 = vld [vmem:[%s1 + $0x40] sm:$0xff]
    %v37 = vld [vmem:[%s1 + $0x48] sm:$0xff]
    %v38 = vld [vmem:[%s1 + $0x50] sm:$0xff]
    %v39 = vld [vmem:[%s1 + $0x58] sm:$0xff]
    %v40 = vld [vmem:[%s1 + $0x60] sm:$0xff]
    %v41 = vld [vmem:[%s1 + $0x68] sm:$0xff]
    %v42 = vld [vmem:[%s1 + $0x70] sm:$0xff]
    %v43 = vld [vmem:[%s1 + $0x78] sm:$0xff]
    %vm44 = vcmask 261120
    %v46 = vsel %vm44, %v24, 0
    %v49 = vsel %vm44, %v25, 0
    %v52 = vsel %vm44, %v28, 0
    %v55 = vsel %vm44, %v29, 0
    %v58 = vsel %vm44, %v30, 0
    %v61 = vsel %vm44, %v31, 0
    %v64 = vsel %vm44, %v32, 0
    %v67 = vsel %vm44, %v33, 0
    %v70 = vsel %vm44, %v34, 0
    %v73 = vsel %vm44, %v35, 0
    %v76 = vsel %vm44, %v36, 0
    %v79 = vsel %vm44, %v37, 0
    %v82 = vsel %vm44, %v38, 0
    %v85 = vsel %vm44, %v39, 0
    %v88 = vsel %vm44, %v40, 0
    %v91 = vsel %vm44, %v41, 0
    %v94 = vsel %vm44, %v42, 0
    %v97 = vsel %vm44, %v43, 0
    %99 = vmatpush.xpose.msra.mxu0 %v97
    %100 = vmatpush.xpose.msra.mxu0 %v94
    %101 = vmatpush.xpose.msra.mxu0 %v91
    %102 = vmatpush.xpose.msra.mxu0 %v88
    %103 = vmatpush.xpose.msra.mxu0 %v85
    %104 = vmatpush.xpose.msra.mxu0 %v82
    %105 = vmatpush.xpose.msra.mxu0 %v79
    %106 = vmatpush.xpose.msra.mxu0 %v76
    %107 = vmatpush.xpose.msra.mxu0 %v73
    %108 = vmatpush.xpose.msra.mxu0 %v70
    %109 = vmatpush.xpose.msra.mxu0 %v67
    %110 = vmatpush.xpose.msra.mxu0 %v64
    %111 = vmatpush.xpose.msra.mxu0 %v61
    %112 = vmatpush.xpose.msra.mxu0 %v58
    %113 = vmatpush.xpose.msra.mxu0 %v55
    %114 = vmatpush.xpose.msra.mxu0 %v52
    %115 = vmatmul.f32.gmra.mxu0 %v46
    %v116 = vpop.f32.mrf.mxu0
    %v117 = vadd.f32 0.0, %v116
    %118 = vmatmul.f32.gmra.mxu0 %v49
    %v119 = vpop.f32.mrf.mxu0
    %v120 = vadd.f32 0.0, %v119
    %121 = vdwg.mxu0
    %v122 = vadd.f32 %v26, %v117
    %v123 = vadd.f32 %v27, %v120
    %124 = vst [vmem:[#allocation2] sm:$0xff] %v122
    %125 = vst [vmem:[#allocation2 + $0x8] sm:$0xff] %v123
    %p126 = scmp.eq.s32.totalorder 0, 0
    // Predicated region
    $region18: #{tpu_custom_call.1} parent=1 // pred_check
      %p127 = pneg %p126
    $region19: #{tpu_custom_call.1} parent=1 // pred_check_branch
      %129 = sbr.rel (%p127) target = $region21
    $region20: #{tpu_custom_call.1} parent=1 // pred_region
      %v130 = vmul.f32 %v24, %v24
      %v131 = vmul.f32 %v25, %v25
      %v132 = vsel %vm44, %v130, 0.0
      %v133 = vsel %vm44, %v131, 0.0
      %v134 = vadd.f32 %v132, %v133
      %v135 = vrot.slane %v134, 4
      %v136 = vadd.f32 %v134, %v135
      %v137 = vrot.slane %v136, 2
      %v138 = vadd.f32 %v136, %v137
      %v139 = vrot.slane %v138, 1
      %v140 = vadd.f32 %v138, %v139
      %vm141 = vcmask 253952
      %142 = vst.msk [vmem:[#allocation5] sm:$0x1] %vm141, %v140
    $region21: #{tpu_custom_call.1} parent=1 // pred_fallthru
      _
    // Predicated region
    $region22: #{tpu_custom_call.1} parent=1 // pred_check
      %p143 = pneg %p18
    $region23: #{tpu_custom_call.1} parent=1 // pred_check_branch
      %145 = sbr.rel (%p143) target = $region25
    $region24: #{tpu_custom_call.1} parent=1 // pred_region
      %v146 = vld [vmem:[#allocation2] sm:$0xff]
      %v147 = vld [vmem:[#allocation2 + $0x8] sm:$0xff]
      %v148 = vld [vmem:[%s2] sm:$0x1]
      %v150 = vperm.slane %v148, 0
      %v152 = vadd.f32 %v146, %v150
      %v153 = vadd.f32 %v147, %v150
      %154 = vst [vmem:[#allocation3] sm:$0xff] %v152
      %155 = vst [vmem:[#allocation3 + $0x8] sm:$0xff] %v153
    $region25: #{tpu_custom_call.1} parent=1 // pred_fallthru
      _
    // Predicated region
    $region26: #{tpu_custom_call.1} parent=1 // pred_check
      _
    $region27: #{tpu_custom_call.1} parent=1 // pred_check_branch
      %157 = sbr.rel (0) target = $region29
    $region28: #{tpu_custom_call.1} parent=1 // pred_region
      %159 = vsyncadd [#allocation4], 0
      %s160 = sshll.u32 [#allocation3], 4
      %s161 = int_to_ptr.vmem [resolvable:$true] %s160
      %s162 = sshll.u32 %s3, 4
      %s163 = int_to_ptr.hbm [resolvable:$true] %s162
      %168 = dma.vmem_to_hbm [thread:$0]  %s161, 256, %s163, [#allocation4], 128, 128, 8
    $region29: #{tpu_custom_call.1} parent=1 // pred_fallthru
      _
    // Predicated region
    $region30: #{tpu_custom_call.1} parent=1 // pred_check
      _
    $region31: #{tpu_custom_call.1} parent=1 // pred_check_branch
      %170 = sbr.rel (0) target = $region33
    $region32: #{tpu_custom_call.1} parent=1 // pred_region
      %172 = vsyncadd [#allocation6], 0
      %s174 = sshll.u32 [#allocation5], 4
      %s175 = int_to_ptr.vmem [resolvable:$true] %s174
      %s176 = sshll.u32 %s4, 4
      %s177 = int_to_ptr.hbm [resolvable:$true] %s176
      %179 = dma.vmem_to_hbm [thread:$0]  %s175, 16, %s177, [#allocation6]
    $region33: #{tpu_custom_call.1} parent=1 // pred_fallthru
      _
    // Predicated region
    $region34: #{tpu_custom_call.1} parent=1 // pred_check
      _
    $region35: #{tpu_custom_call.1} parent=1 // pred_check_branch
      %181 = sbr.rel (0) target = $region37
    $region36: #{tpu_custom_call.1} parent=1 // pred_region
      %183 = dma.done [#allocation4], 256
    $region37: #{tpu_custom_call.1} parent=1 // pred_fallthru
      _
    // Predicated region
    $region38: #{tpu_custom_call.1} parent=1 // pred_check
      _
    $region39: #{tpu_custom_call.1} parent=1 // pred_check_branch
      %185 = sbr.rel (0) target = $region41
    $region40: #{tpu_custom_call.1} parent=1 // pred_region
      %187 = dma.done [#allocation6], 16
    $region41: #{tpu_custom_call.1} parent=1 // pred_fallthru
      _
    %188 = vsyncpa [#allocation4], 1
    %189 = vsyncpa [#allocation6], 1

</llo_original>
